<compile_context>
chip_gen: v6e
topology: v6e:2x2x1
jax: 0.10.0
libtpu: 0.0.40
codegen_flags: <defaults>
</compile_context>

<pallas_src>
import jax
import jax.numpy as jnp
from jax.experimental import pallas as pl
from jax.experimental.pallas import tpu as pltpu


def _round_up(x, m):
    return (x + m - 1) // m * m


# ---------------------------------------------------------------------------
# Path A: whole weight resident in VMEM, grid over row tiles only.
#   x_ref : (tm, H_pad)      w_ref : (H_pad, H_pad)
#   b_ref : (1,  H_pad)      o_ref : (tm, H_pad)
# Residual is x_ref itself -> no extra HBM read, no scratch, no k loop.
# ---------------------------------------------------------------------------
def residual_linear_kernel_full(x_ref, w_ref, b_ref, o_ref):
    x = x_ref[...]
    y = jnp.dot(x, w_ref[...], preferred_element_type=jnp.float32)
    y = y + b_ref[...].astype(jnp.float32) + x.astype(jnp.float32)
    o_ref[...] = y.astype(o_ref.dtype)


# ---------------------------------------------------------------------------
# Path B: large hidden -> 3-D grid (i over M, j over N, k over K), tn == tk.
#   x_ref : (tm, tk) block (i, k)      w_ref : (tk, tn) block (k, j)
#   b_ref : (1,  tn) block (0, j)      o_ref : (tm, tn) block (i, j)
#   acc_ref: (tm, tn) f32 scratch carried across k.
# Residual is folded in at k == j (that x tile IS the residual block (i, j)).
# ---------------------------------------------------------------------------
def residual_linear_kernel_tiled(x_ref, w_ref, b_ref, o_ref, acc_ref):
    j = pl.program_id(1)
    k = pl.program_id(2)

    @pl.when(k == 0)
    def _init():
        # Seed the accumulator with the broadcast bias: removes the bias add
        # (and its dependency) from the epilogue.
        acc_ref[...] = jnp.broadcast_to(
            b_ref[...].astype(jnp.float32), acc_ref.shape)

    acc_ref[...] += jnp.dot(
        x_ref[...], w_ref[...], preferred_element_type=jnp.float32)

    @pl.when(k == j)
    def _fold_residual():
        # Valid because tn == tk and j, k tile the same padded H.
        acc_ref[...] += x_ref[...].astype(jnp.float32)

    @pl.when(k == pl.num_programs(2) - 1)
    def _epilogue():
        o_ref[...] = acc_ref[...].astype(o_ref.dtype)


def residual_add_linear(x, w, b):
    """ResidualAdd(Linear): x (B,S,H), w (H,H), b (H,) -> (B,S,H), same dtype."""
    B, S, H = x.shape
    assert w.shape == (H, H) and b.shape == (H,)
    M = B * S
    dtype = x.dtype
    itemsize = jnp.dtype(dtype).itemsize

    # Sublane packing: 8 rows (f32), 16 (bf16), 32 (int8/fp8).
    sub = max(8, 32 // itemsize)

    # Lane padding target: 256 unconditionally (v6e/v7x MXU is 2x256^2);
    # zero-padded K rows / bias / residual columns are semantically inert.
    H_pad = _round_up(H, 256)

    # Row tile: as big as the VMEM budget allows (per-grid-step overhead
    # ~0.35us dominates small tiles), rounded to the sublane packing.
    tm = min(1024, _round_up(M, sub))

    # Path A if the full weight + a full-width x strip fit comfortably in
    # VMEM (<=1024 f32 / <=2048 bf16 hidden).
    full_k = H_pad * itemsize <= 4096
    VMEM_BUDGET = 40 << 20  # leaves headroom inside v7x's 64 MiB physical VMEM

    if full_k:
        tn = tk = H_pad

        def est(tm_):  # x strip + out strip + full weight + bias, double-buffered
            return 2 * itemsize * (2 * tm_ * H_pad + H_pad * H_pad + H_pad)
    else:
        tn = tk = 512 if H_pad % 512 == 0 else 256

        def est(tm_):  # tiles double-buffered + f32 accumulator scratch
            return (2 * itemsize * (tm_ * tk + tk * tn + tn + tm_ * tn)
                    + 4 * tm_ * tn)

    while est(tm) > VMEM_BUDGET and tm > sub:
        tm = max(sub, (tm // 2 + sub - 1) // sub * sub)

    # Keep >=2 row tiles when there is real work, so both v7x TCs get a share.
    if full_k and M > 256 and tm >= M:
        tm = _round_up((M + 1) // 2, sub)

    vmem_est = est(tm)
    vmem_limit = int(min(48 << 20, max(32 << 20, 2 * vmem_est)))

    M_pad = _round_up(M, tm)

    # ---- pad to tile boundaries (zero padding is inert) --------------------
    x2d = x.reshape(M, H)
    if (M_pad, H_pad) != (M, H):
        x2d = jnp.pad(x2d, ((0, M_pad - M), (0, H_pad - H)))
    w_p = jnp.pad(w, ((0, H_pad - H), (0, H_pad - H))) if H_pad != H else w
    b2d = (jnp.pad(b, ((0, H_pad - H),)) if H_pad != H else b).reshape(1, H_pad)

    flops = 2 * M_pad * H_pad * H_pad

    if full_k:
        grid = (M_pad // tm,)
        cost = pl.CostEstimate(
            flops=flops, transcendentals=0,
            bytes_accessed=itemsize * (2 * M_pad * H_pad      # x + out
                                       + H_pad * H_pad        # weight (resident)
                                       + H_pad))              # bias
        out = pl.pallas_call(
            residual_linear_kernel_full,
            out_shape=jax.ShapeDtypeStruct((M_pad, H_pad), dtype),
            grid=grid,
            in_specs=[
                pl.BlockSpec((tm, H_pad), lambda i: (i, 0)),     # x strip (matmul + residual)
                pl.BlockSpec((H_pad, H_pad), lambda i: (0, 0)),  # full weight
                pl.BlockSpec((1, H_pad), lambda i: (0, 0)),      # bias
            ],
            out_specs=pl.BlockSpec((tm, H_pad), lambda i: (i, 0)),
            compiler_params=pltpu.CompilerParams(
                dimension_semantics=("parallel",),
                vmem_limit_bytes=vmem_limit),
            cost_estimate=cost,
        )(x2d, w_p, b2d)
    else:
        # Residual fold at k == j is only valid while j and k tile the same
        # padded H with identical tile widths.
        assert tn == tk and H_pad % tn == 0
        grid = (M_pad // tm, H_pad // tn, H_pad // tk)
        cost = pl.CostEstimate(
            flops=flops, transcendentals=0,
            bytes_accessed=itemsize * (
                M_pad * H_pad * (H_pad // tn)      # x re-read once per j tile
                + H_pad * H_pad * (M_pad // tm)    # w re-read once per i tile
                + H_pad * (M_pad // tm)            # bias
                + M_pad * H_pad))                  # output
        out = pl.pallas_call(
            residual_linear_kernel_tiled,
            out_shape=jax.ShapeDtypeStruct((M_pad, H_pad), dtype),
            grid=grid,
            in_specs=[
                pl.BlockSpec((tm, tk), lambda i, j, k: (i, k)),  # x (matmul; residual at k==j)
                pl.BlockSpec((tk, tn), lambda i, j, k: (k, j)),  # weight tile
                pl.BlockSpec((1, tn), lambda i, j, k: (0, j)),   # bias tile
            ],
            out_specs=pl.BlockSpec((tm, tn), lambda i, j, k: (i, j)),
            scratch_shapes=[pltpu.VMEM((tm, tn), jnp.float32)],
            compiler_params=pltpu.CompilerParams(
                dimension_semantics=("parallel", "parallel", "arbitrary"),
                vmem_limit_bytes=vmem_limit),
            cost_estimate=cost,
        )(x2d, w_p, b2d)

    return out[:M, :H].reshape(B, S, H)


# TODO(synk): ResidualAdd wraps an arbitrary `fn`; only fn = Linear is fused here.

if __name__ == "__main__":
    key = jax.random.PRNGKey(0)

    def ref_fn(x, w, b):
        return jnp.einsum("bsh,hk->bsk", x, w) + b + x

    # --- small shape consistent with the module (batch=2, seq=8, hidden=32) --
    B, S, H = 2, 8, 32
    kx, kw, kb = jax.random.split(key, 3)
    x = jax.random.normal(kx, (B, S, H), dtype=jnp.float32)
    w = jax.random.normal(kw, (H, H), dtype=jnp.float32) * (1.0 / jnp.sqrt(H))
    b = jax.random.normal(kb, (H,), dtype=jnp.float32) * 0.01

    out = jax.block_until_ready(residual_add_linear(x, w, b))
    assert jnp.allclose(out, ref_fn(x, w, b), atol=1e-4, rtol=1e-4), \
        "mismatch (small / path A)"

    # --- path A with multiple row tiles and non-256-aligned hidden -----------
    B2, S2, H2 = 2, 160, 384
    kx2, kw2, kb2 = jax.random.split(jax.random.PRNGKey(1), 3)
    x2 = jax.random.normal(kx2, (B2, S2, H2), dtype=jnp.float32)
    w2 = jax.random.normal(kw2, (H2, H2), dtype=jnp.float32) * (1.0 / jnp.sqrt(H2))
    b2 = jax.random.normal(kb2, (H2,), dtype=jnp.float32) * 0.01

    out2 = jax.block_until_ready(residual_add_linear(x2, w2, b2))
    assert jnp.allclose(out2, ref_fn(x2, w2, b2), atol=2e-3, rtol=2e-3), \
        "mismatch (padded / multi row-tile path A)"

    # --- path B: large hidden -> 3-D grid, k accumulation, k==j residual fold
    B3, S3, H3 = 2, 16, 1280
    kx3, kw3, kb3 = jax.random.split(jax.random.PRNGKey(2), 3)
    x3 = jax.random.normal(kx3, (B3, S3, H3), dtype=jnp.float32)
    w3 = jax.random.normal(kw3, (H3, H3), dtype=jnp.float32) * (1.0 / jnp.sqrt(H3))
    b3 = jax.random.normal(kb3, (H3,), dtype=jnp.float32) * 0.01

    out3 = jax.block_until_ready(residual_add_linear(x3, w3, b3))
    assert jnp.allclose(out3, ref_fn(x3, w3, b3), atol=2e-3, rtol=2e-3), \
        "mismatch (tiled path B)"

    print("KERNEL_OK")
</pallas_src>

<mosaic_0001>
module attributes {stable_mosaic.version = 11 : i64} {
  func.func @residual_linear_kernel_full(%arg0: i32, %arg1: memref<16x256xf32, #tpu.memory_space<vmem>>, %arg2: memref<256x256xf32, #tpu.memory_space<vmem>>, %arg3: memref<1x256xf32, #tpu.memory_space<vmem>>, %arg4: memref<16x256xf32, #tpu.memory_space<vmem>>) attributes {dimension_semantics = [#tpu.dimension_semantics<parallel>], iteration_bounds = array<i64: 1>, scalar_prefetch = 0 : i64, scratch_operands = 0 : i64, tpu.core_type = #tpu.core_type<tc>, window_params = [{transform_indices = @transform_0, window_bounds = array<i64: 16, 256>}, {pipeline_mode = #tpu.pipeline_mode<synchronous>, transform_indices = @transform_1, window_bounds = array<i64: 256, 256>}, {pipeline_mode = #tpu.pipeline_mode<synchronous>, transform_indices = @transform_2, window_bounds = array<i64: 1, 256>}, {transform_indices = @transform_3, window_bounds = array<i64: 16, 256>}]} {
    %c0 = arith.constant 0 : index
    %c0_0 = arith.constant 0 : index
    %0 = vector.load %arg1[%c0, %c0_0] : memref<16x256xf32, #tpu.memory_space<vmem>>, vector<16x256xf32>
    %c0_1 = arith.constant 0 : index
    %c0_2 = arith.constant 0 : index
    %1 = vector.load %arg2[%c0_1, %c0_2] : memref<256x256xf32, #tpu.memory_space<vmem>>, vector<256x256xf32>
    %cst = arith.constant dense<0.000000e+00> : vector<16x256xf32>
    %2 = tpu.matmul %0, %1, %cst {dimension_numbers = #tpu.dot_dimension_numbers<[1], [0], [0], [1], [0, 0, 1, 1], [], []>} : vector<16x256xf32>, vector<256x256xf32>, vector<16x256xf32> -> vector<16x256xf32>
    %c0_3 = arith.constant 0 : index
    %c0_4 = arith.constant 0 : index
    %3 = vector.load %arg3[%c0_3, %c0_4] : memref<1x256xf32, #tpu.memory_space<vmem>>, vector<1x256xf32>
    %4 = vector.broadcast %3 : vector<1x256xf32> to vector<16x256xf32>
    %5 = arith.addf %2, %4 : vector<16x256xf32>
    %6 = arith.addf %5, %0 : vector<16x256xf32>
    %c0_5 = arith.constant 0 : index
    %c0_6 = arith.constant 0 : index
    %7 = vector.load %arg4[%c0_5, %c0_6] : memref<16x256xf32, #tpu.memory_space<vmem>>, vector<16x256xf32>
    tpu.vector_store %arg4[%c0_5, %c0_6], %6 {strides = array<i32>} : memref<16x256xf32, #tpu.memory_space<vmem>>, vector<16x256xf32>,
    return
  }
  func.func @transform_0(%arg0: i32) -> (i32, i32) {
    %c0_i32 = arith.constant 0 : i32
    %c0_i32_0 = arith.constant 0 : i32
    return %arg0, %c0_i32 : i32, i32
  }
  func.func @transform_1(%arg0: i32) -> (i32, i32) {
    %c0_i32 = arith.constant 0 : i32
    %c0_i32_0 = arith.constant 0 : i32
    %c0_i32_1 = arith.constant 0 : i32
    return %c0_i32, %c0_i32_0 : i32, i32
  }
  func.func @transform_2(%arg0: i32) -> (i32, i32) {
    %c0_i32 = arith.constant 0 : i32
    %c0_i32_0 = arith.constant 0 : i32
    %c0_i32_1 = arith.constant 0 : i32
    return %c0_i32, %c0_i32_0 : i32, i32
  }
  func.func @transform_3(%arg0: i32) -> (i32, i32) {
    %c0_i32 = arith.constant 0 : i32
    %c0_i32_0 = arith.constant 0 : i32
    return %arg0, %c0_i32 : i32, i32
  }
}

</mosaic_0001>

<llo_original>
// kernel: tpu_custom_call.1
$region0: #{tpu_custom_call.1}
  #allocation0 [shape = 'u32[]', space=smem, size = 0x4, offset = 0x4, fixed_abs, tag = 'smem constant byte address 0x4 - core index']
  #allocation1 [shape = 'u32[144,128]{1,0:T(1,128)}', space=vmem, size = 0x12000, scoped, tag = 'internal scratch']
  %s0 = inlined_call_operand.hbm [shape: f32[16,256], index: 0, kind: input, shape index: {}]
  %s1 = inlined_call_operand.hbm [shape: f32[256,256], index: 1, kind: input, shape index: {}]
  %s2 = inlined_call_operand.vmem [shape: f32[1,256], index: 2, kind: input, shape index: {}]
  %s3 = inlined_call_operand.hbm [shape: f32[16,256], index: 3, kind: output, shape index: {}]
  %s4 = sld [smem:[#allocation0]]
  $region30: #{tpu_custom_call.1} parent=0
    _
  %s6 = ssub.s32 1, %s4
  %s7 = scalar_select 0, %s6, %s4
  $region1: #{tpu_custom_call.1} parent=0
    #allocation2 [shape = 'u8[16384]{0}', space=vmem, size = 0x4000, scoped, tag = 'input window, operand 0, single buffered']
    #allocation3 [shape = 's32[1]{0}', space=sflag, size = 0x4, scoped, tag = 'scoped memory for tpu_custom_call.1']
    #allocation4 [shape = 's32[1]{0}', space=sflag, size = 0x4, scoped, tag = 'scoped memory for tpu_custom_call.1']
    #allocation5 [shape = 'u8[262144]{0}', space=vmem, size = 0x40000, scoped, tag = 'input window, operand 1, single buffered']
    #allocation6 [shape = 's32[1]{0}', space=sflag, size = 0x4, scoped, tag = 'scoped memory for tpu_custom_call.1']
    #allocation7 [shape = 'u8[16384]{0}', space=vmem, size = 0x4000, scoped, tag = 'output window, operand 0, single buffered']
    %8 = vsyncpa [#allocation3], 0
    %9 = vsyncpa [#allocation6], 0
    %10 = vsyncpa [#allocation4], 0
    // Predicated region
    $region2: #{tpu_custom_call.1} parent=1 // pred_check
      _
    $region3: #{tpu_custom_call.1} parent=1 // pred_check_branch
      %12 = sbr.rel (0) target = $region5
    $region4: #{tpu_custom_call.1} parent=1 // pred_region
      %s14 = ssub.s32 512, 512
      %15 = vsyncadd [#allocation3], %s14
      %s16 = sshll.u32 [#allocation2], 4
      %s17 = int_to_ptr.vmem [resolvable:$true] %s16
      %22 = dma.hbm_to_vmem [thread:$0]  %s0, 512, %s17, [#allocation3], 256, 256, 16
    $region5: #{tpu_custom_call.1} parent=1 // pred_fallthru
      _
    // Predicated region
    $region6: #{tpu_custom_call.1} parent=1 // pred_check
      _
    $region7: #{tpu_custom_call.1} parent=1 // pred_check_branch
      %24 = sbr.rel (0) target = $region9
    $region8: #{tpu_custom_call.1} parent=1 // pred_region
      %s26 = ssub.s32 8192, 8192
      %27 = vsyncadd [#allocation6], %s26
      %s28 = sshll.u32 [#allocation5], 4
      %s29 = int_to_ptr.vmem [resolvable:$true] %s28
      %34 = dma.hbm_to_vmem [thread:$0]  %s1, 8192, %s29, [#allocation6], 256, 256, 16
    $region9: #{tpu_custom_call.1} parent=1 // pred_fallthru
      _
    // Predicated region
    $region10: #{tpu_custom_call.1} parent=1 // pred_check
      _
    $region11: #{tpu_custom_call.1} parent=1 // pred_check_branch
      %36 = sbr.rel (0) target = $region13
    $region12: #{tpu_custom_call.1} parent=1 // pred_region
      _
    $region13: #{tpu_custom_call.1} parent=1 // pred_fallthru
      _
    // Predicated region
    $region14: #{tpu_custom_call.1} parent=1 // pred_check
      _
    $region15: #{tpu_custom_call.1} parent=1 // pred_check_branch
      %38 = sbr.rel (0) target = $region17
    $region16: #{tpu_custom_call.1} parent=1 // pred_region
      %39 = dma.done [#allocation3], 512
    $region17: #{tpu_custom_call.1} parent=1 // pred_fallthru
      _
    // Predicated region
    $region18: #{tpu_custom_call.1} parent=1 // pred_check
      _
    $region19: #{tpu_custom_call.1} parent=1 // pred_check_branch
      %41 = sbr.rel (0) target = $region21
    $region20: #{tpu_custom_call.1} parent=1 // pred_region
      %42 = dma.done [#allocation6], 8192
    $region21: #{tpu_custom_call.1} parent=1 // pred_fallthru
      _
    %v43 = vld [vmem:[#allocation2] sm:$0xff]
    %v44 = vld [vmem:[#allocation2 + $0x8] sm:$0xff]
    %v45 = vld [vmem:[#allocation2 + $0x10] sm:$0xff]
    %v46 = vld [vmem:[#allocation2 + $0x18] sm:$0xff]
    %v47 = vld [vmem:[#allocation5] sm:$0xff]
    %v48 = vld [vmem:[#allocation5 + $0x8] sm:$0xff]
    %v49 = vld [vmem:[#allocation5 + $0x10] sm:$0xff]
    %v50 = vld [vmem:[#allocation5 + $0x18] sm:$0xff]
    %v51 = vld [vmem:[#allocation5 + $0x20] sm:$0xff]
    %v52 = vld [vmem:[#allocation5 + $0x28] sm:$0xff]
    %v53 = vld [vmem:[#allocation5 + $0x30] sm:$0xff]
    %v54 = vld [vmem:[#allocation5 + $0x38] sm:$0xff]
    %v55 = vld [vmem:[#allocation5 + $0x40] sm:$0xff]
    %v56 = vld [vmem:[#allocation5 + $0x48] sm:$0xff]
    %v57 = vld [vmem:[#allocation5 + $0x50] sm:$0xff]
    %v58 = vld [vmem:[#allocation5 + $0x58] sm:$0xff]
    %v59 = vld [vmem:[#allocation5 + $0x60] sm:$0xff]
    %v60 = vld [vmem:[#allocation5 + $0x68] sm:$0xff]
    %v61 = vld [vmem:[#allocation5 + $0x70] sm:$0xff]
    %v62 = vld [vmem:[#allocation5 + $0x78] sm:$0xff]
    %v63 = vld [vmem:[#allocation5 + $0x80] sm:$0xff]
    %v64 = vld [vmem:[#allocation5 + $0x88] sm:$0xff]
    %v65 = vld [vmem:[#allocation5 + $0x90] sm:$0xff]
    %v66 = vld [vmem:[#allocation5 + $0x98] sm:$0xff]
    %v67 = vld [vmem:[#allocation5 + $0xa0] sm:$0xff]
    %v68 = vld [vmem:[#allocation5 + $0xa8] sm:$0xff]
    %v69 = vld [vmem:[#allocation5 + $0xb0] sm:$0xff]
    %v70 = vld [vmem:[#allocation5 + $0xb8] sm:$0xff]
    %v71 = vld [vmem:[#allocation5 + $0xc0] sm:$0xff]
    %v72 = vld [vmem:[#allocation5 + $0xc8] sm:$0xff]
    %v73 = vld [vmem:[#allocation5 + $0xd0] sm:$0xff]
    %v74 = vld [vmem:[#allocation5 + $0xd8] sm:$0xff]
    %v75 = vld [vmem:[#allocation5 + $0xe0] sm:$0xff]
    %v76 = vld [vmem:[#allocation5 + $0xe8] sm:$0xff]
    %v77 = vld [vmem:[#allocation5 + $0xf0] sm:$0xff]
    %v78 = vld [vmem:[#allocation5 + $0xf8] sm:$0xff]
    %v79 = vld [vmem:[#allocation5 + $0x100] sm:$0xff]
    %v80 = vld [vmem:[#allocation5 + $0x108] sm:$0xff]
    %v81 = vld [vmem:[#allocation5 + $0x110] sm:$0xff]
    %v82 = vld [vmem:[#allocation5 + $0x118] sm:$0xff]
    %v83 = vld [vmem:[#allocation5 + $0x120] sm:$0xff]
    %v84 = vld [vmem:[#allocation5 + $0x128] sm:$0xff]
    %v85 = vld [vmem:[#allocation5 + $0x130] sm:$0xff]
    %v86 = vld [vmem:[#allocation5 + $0x138] sm:$0xff]
    %v87 = vld [vmem:[#allocation5 + $0x140] sm:$0xff]
    %v88 = vld [vmem:[#allocation5 + $0x148] sm:$0xff]
    %v89 = vld [vmem:[#allocation5 + $0x150] sm:$0xff]
    %v90 = vld [vmem:[#allocation5 + $0x158] sm:$0xff]
    %v91 = vld [vmem:[#allocation5 + $0x160] sm:$0xff]
    %v92 = vld [vmem:[#allocation5 + $0x168] sm:$0xff]
    %v93 = vld [vmem:[#allocation5 + $0x170] sm:$0xff]
    %v94 = vld [vmem:[#allocation5 + $0x178] sm:$0xff]
    %v95 = vld [vmem:[#allocation5 + $0x180] sm:$0xff]
    %v96 = vld [vmem:[#allocation5 + $0x188] sm:$0xff]
    %v97 = vld [vmem:[#allocation5 + $0x190] sm:$0xff]
    %v98 = vld [vmem:[#allocation5 + $0x198] sm:$0xff]
    %v99 = vld [vmem:[#allocation5 + $0x1a0] sm:$0xff]
    %v100 = vld [vmem:[#allocation5 + $0x1a8] sm:$0xff]
    %v101 = vld [vmem:[#allocation5 + $0x1b0] sm:$0xff]
    %v102 = vld [vmem:[#allocation5 + $0x1b8] sm:$0xff]
    %v103 = vld [vmem:[#allocation5 + $0x1c0] sm:$0xff]
    %v104 = vld [vmem:[#allocation5 + $0x1c8] sm:$0xff]
    %v105 = vld [vmem:[#allocation5 + $0x1d0] sm:$0xff]
    %v106 = vld [vmem:[#allocation5 + $0x1d8] sm:$0xff]
    %v107 = vld [vmem:[#allocation5 + $0x1e0] sm:$0xff]
    %v108 = vld [vmem:[#allocation5 + $0x1e8] sm:$0xff]
    %v109 = vld [vmem:[#allocation5 + $0x1f0] sm:$0xff]
    %v110 = vld [vmem:[#allocation5 + $0x1f8] sm:$0xff]
    %v111 = vld [vmem:[%s2] sm:$0x3]
    %v113 = vlaneseq
    %v114 = vshrl.u32 %v113, 7
    %v115 = vsub.s32 0, %v114
    %v116 = vrot.slane %v111, %v115
    %v117 = vlaneseq
    %v118 = vshrl.u32 %v117, 7
    %v119 = vsub.s32 1, %v118
    %v120 = vrot.slane %v111, %v119
    %123 = vmatprep.subr.mxu0 %v78
    %124 = vmatpush1.msra.mxu0 %v77
    %125 = vmatprep.subr.mxu0 %v76
    %126 = vmatpush1.msra.mxu0 %v75
    %127 = vmatprep.subr.mxu0 %v74
    %128 = vmatpush1.msra.mxu0 %v73
    %129 = vmatprep.subr.mxu0 %v72
    %130 = vmatpush1.msra.mxu0 %v71
    %131 = vmatprep.subr.mxu0 %v70
    %132 = vmatpush1.msra.mxu0 %v69
    %133 = vmatprep.subr.mxu0 %v68
    %134 = vmatpush1.msra.mxu0 %v67
    %135 = vmatprep.subr.mxu0 %v66
    %136 = vmatpush1.msra.mxu0 %v65
    %137 = vmatprep.subr.mxu0 %v64
    %138 = vmatpush1.msra.mxu0 %v63
    %139 = vmatprep.subr.mxu0 %v62
    %140 = vmatpush1.msra.mxu0 %v61
    %141 = vmatprep.subr.mxu0 %v60
    %142 = vmatpush1.msra.mxu0 %v59
    %143 = vmatprep.subr.mxu0 %v58
    %144 = vmatpush1.msra.mxu0 %v57
    %145 = vmatprep.subr.mxu0 %v56
    %146 = vmatpush1.msra.mxu0 %v55
    %147 = vmatprep.subr.mxu0 %v54
    %148 = vmatpush1.msra.mxu0 %v53
    %149 = vmatprep.subr.mxu0 %v52
    %150 = vmatpush1.msra.mxu0 %v51
    %151 = vmatprep.subr.mxu0 %v50
    %152 = vmatpush1.msra.mxu0 %v49
    %153 = vmatprep.subr.mxu0 %v48
    %154 = vmatpush1.msra.mxu0 %v47
    %155 = vmatprep.subr.mxu0 %v110
    %156 = vmatpush2.msra.mxu0 %v109
    %157 = vmatprep.subr.mxu0 %v108
    %158 = vmatpush2.msra.mxu0 %v107
    %159 = vmatprep.subr.mxu0 %v106
    %160 = vmatpush2.msra.mxu0 %v105
    %161 = vmatprep.subr.mxu0 %v104
    %162 = vmatpush2.msra.mxu0 %v103
    %163 = vmatprep.subr.mxu0 %v102
    %164 = vmatpush2.msra.mxu0 %v101
    %165 = vmatprep.subr.mxu0 %v100
    %166 = vmatpush2.msra.mxu0 %v99
    %167 = vmatprep.subr.mxu0 %v98
    %168 = vmatpush2.msra.mxu0 %v97
    %169 = vmatprep.subr.mxu0 %v96
    %170 = vmatpush2.msra.mxu0 %v95
    %171 = vmatprep.subr.mxu0 %v94
    %172 = vmatpush2.msra.mxu0 %v93
    %173 = vmatprep.subr.mxu0 %v92
    %174 = vmatpush2.msra.mxu0 %v91
    %175 = vmatprep.subr.mxu0 %v90
    %176 = vmatpush2.msra.mxu0 %v89
    %177 = vmatprep.subr.mxu0 %v88
    %178 = vmatpush2.msra.mxu0 %v87
    %179 = vmatprep.subr.mxu0 %v86
    %180 = vmatpush2.msra.mxu0 %v85
    %181 = vmatprep.subr.mxu0 %v84
    %182 = vmatpush2.msra.mxu0 %v83
    %183 = vmatprep.subr.mxu0 %v82
    %184 = vmatpush2.msra.mxu0 %v81
    %185 = vmatprep.subr.mxu0 %v80
    %186 = vmatpush2.msra.mxu0 %v79
    %187 = vmatprep.mubr.f32.mxu0 %v44
    %188 = vmatmul.mubr.f32.gmra.mxu0 %v43
    %v189 = vpop.f32.mrf.mxu0
    %v190 = vadd.f32 %v116, %v189
    %v191 = vpop.f32.mrf.mxu0
    %v192 = vadd.f32 %v120, %v191
    %193 = vmatprep.mubr.f32.mxu0 %v46
    %194 = vmatmul.mubr.f32.gmra.mxu0 %v45
    %v195 = vpop.f32.mrf.mxu0
    %v196 = vadd.f32 %v116, %v195
    %v197 = vpop.f32.mrf.mxu0
    %v198 = vadd.f32 %v120, %v197
    %199 = vdwg.mxu0
    %v200 = vadd.f32 %v190, %v43
    %v201 = vadd.f32 %v192, %v44
    %v202 = vadd.f32 %v196, %v45
    %v203 = vadd.f32 %v198, %v46
    %204 = vst [vmem:[#allocation7] sm:$0xff] %v200
    %205 = vst [vmem:[#allocation7 + $0x8] sm:$0xff] %v201
    %206 = vst [vmem:[#allocation7 + $0x10] sm:$0xff] %v202
    %207 = vst [vmem:[#allocation7 + $0x18] sm:$0xff] %v203
    // Predicated region
    $region22: #{tpu_custom_call.1} parent=1 // pred_check
      _
    $region23: #{tpu_custom_call.1} parent=1 // pred_check_branch
      %209 = sbr.rel (0) target = $region25
    $region24: #{tpu_custom_call.1} parent=1 // pred_region
      %s211 = ssub.s32 512, 512
      %212 = vsyncadd [#allocation4], %s211
      %s213 = sshll.u32 [#allocation7], 4
      %s214 = int_to_ptr.vmem [resolvable:$true] %s213
      %219 = dma.vmem_to_hbm [thread:$0]  %s214, 512, %s3, [#allocation4], 256, 256, 16
    $region25: #{tpu_custom_call.1} parent=1 // pred_fallthru
      _
    // Predicated region
    $region26: #{tpu_custom_call.1} parent=1 // pred_check
      _
    $region27: #{tpu_custom_call.1} parent=1 // pred_check_branch
      %221 = sbr.rel (0) target = $region29
    $region28: #{tpu_custom_call.1} parent=1 // pred_region
      %222 = dma.done [#allocation4], 512
    $region29: #{tpu_custom_call.1} parent=1 // pred_fallthru
      _
    %223 = vsyncpa [#allocation3], 1
    %224 = vsyncpa [#allocation6], 1
    %225 = vsyncpa [#allocation4], 1

</llo_original>
